<compile_context>
chip_gen: v6e
topology: v6e:2x2x1
jax: 0.10.0
libtpu: 0.0.40
codegen_flags: <defaults>
</compile_context>

<pallas_src>
import jax
import jax.numpy as jnp
from jax.experimental import pallas as pl
from jax.experimental.pallas import tpu as pltpu

_LANES = 128                      # vreg lane width — last dim of the slab
_SMALL_FAST_PATH_ELEMS = 256 * 1024  # below this, plain XLA `x * 0` wins


def _zero_kernel(x_ref, o_ref):
    # Strict `x * 0` semantics (NaN * 0 = NaN, Inf * 0 = NaN), same as torch.
    o_ref[...] = x_ref[...] * jnp.zeros((), dtype=x_ref.dtype)


def _device_kind():
    try:
        return jax.devices()[0].device_kind.lower()
    except Exception:
        return ""


def _block_bytes_target(kind):
    # 2 operands x 2 pipeline buffers => peak VMEM ~= 4x the block size.
    if "v5" in kind:
        return 1 << 20            # 1 MiB block  -> ~4 MiB peak (16 MiB scoped default)
    if "v6" in kind or "v7" in kind:
        return 4 << 20            # 4 MiB block  -> ~16 MiB peak (32 MiB scoped default)
    return 2 << 20                # unknown chip -> conservative 2 MiB block


def zero_forward(x, *, force_pallas=False):
    """Pallas equivalent of Zero.forward: returns x * 0 with same shape/dtype."""
    orig_shape = x.shape
    dtype = x.dtype
    total = x.size

    # ---- small-tensor fast path: fused XLA elementwise, no kernel launch ----
    if total == 0 or (total <= _SMALL_FAST_PATH_ELEMS and not force_pallas):
        return x * jnp.zeros((), dtype=dtype)

    itemsize = jnp.dtype(dtype).itemsize
    sublane_mult = max(8, 32 // max(itemsize, 1))   # 8 (f32) / 16 (bf16) / 32 (i8)

    rows = pl.cdiv(total, _LANES)
    rows_aligned = ((rows + sublane_mult - 1) // sublane_mult) * sublane_mult

    kind = _device_kind()
    block_rows = max(sublane_mult,
                     _block_bytes_target(kind) // (_LANES * itemsize))
    block_rows = (block_rows // sublane_mult) * sublane_mult
    block_rows = min(block_rows, rows_aligned)

    # v7x has 2 TensorCores per chip: make sure the parallel grid axis has at
    # least 2 blocks whenever the slab is big enough to split.
    if "v7" in kind and rows_aligned <= block_rows and rows_aligned >= 2 * sublane_mult:
        half = pl.cdiv(rows_aligned, 2)
        block_rows = ((half + sublane_mult - 1) // sublane_mult) * sublane_mult

    grid = (pl.cdiv(rows_aligned, block_rows),)   # trailing partial block is masked

    # ---- wrapper-side layout plumbing: lane-dense (rows, 128) slab ----------
    padded_total = rows_aligned * _LANES
    flat = x.reshape(-1)
    if padded_total != total:                     # at most sublane_mult*128-1 elems
        flat = jnp.pad(flat, (0, padded_total - total))
    x2d = flat.reshape(rows_aligned, _LANES)

    out2d = pl.pallas_call(
        _zero_kernel,
        out_shape=jax.ShapeDtypeStruct((rows_aligned, _LANES), dtype),
        grid=grid,
        in_specs=[pl.BlockSpec((block_rows, _LANES), lambda i: (i, 0))],
        out_specs=pl.BlockSpec((block_rows, _LANES), lambda i: (i, 0)),
        compiler_params=pltpu.CompilerParams(
            dimension_semantics=("parallel",),
        ),
    )(x2d)

    out_flat = out2d.reshape(-1)
    if padded_total != total:
        out_flat = out_flat[:total]
    return out_flat.reshape(orig_shape)


if __name__ == "__main__":
    key = jax.random.PRNGKey(0)
    # NCHW input, small shapes: batch=2, channels=4, spatial=16x16
    x = jax.random.normal(key, (2, 4, 16, 16), dtype=jnp.float32)

    # Exercise the Pallas kernel explicitly (the default path would take the
    # small-tensor XLA fast path for this tiny example).
    out_pallas = jax.block_until_ready(zero_forward(x, force_pallas=True))
    out_fast = jax.block_until_ready(zero_forward(x))

    # Correctness check against reference semantics (x * 0).
    expected = x * 0
    assert out_pallas.shape == expected.shape and out_pallas.dtype == expected.dtype
    assert jnp.array_equal(out_pallas, expected)
    assert out_fast.shape == expected.shape and out_fast.dtype == expected.dtype
    assert jnp.array_equal(out_fast, expected)

    print("KERNEL_OK")
</pallas_src>

<mosaic_0001>
module attributes {stable_mosaic.version = 11 : i64} {
  func.func @_zero_kernel(%arg0: i32, %arg1: memref<16x128xf32, #tpu.memory_space<vmem>>, %arg2: memref<16x128xf32, #tpu.memory_space<vmem>>) attributes {dimension_semantics = [#tpu.dimension_semantics<parallel>], iteration_bounds = array<i64: 1>, scalar_prefetch = 0 : i64, scratch_operands = 0 : i64, tpu.core_type = #tpu.core_type<tc>, window_params = [{transform_indices = @transform_0, window_bounds = array<i64: 16, 128>}, {transform_indices = @transform_1, window_bounds = array<i64: 16, 128>}]} {
    %c0 = arith.constant 0 : index
    %c0_0 = arith.constant 0 : index
    %0 = vector.load %arg1[%c0, %c0_0] : memref<16x128xf32, #tpu.memory_space<vmem>>, vector<16x128xf32>
    %cst = arith.constant 0.000000e+00 : f32
    %1 = vector.broadcast %cst : f32 to vector<16x128xf32>
    %2 = arith.mulf %0, %1 : vector<16x128xf32>
    %c0_1 = arith.constant 0 : index
    %c0_2 = arith.constant 0 : index
    %3 = vector.load %arg2[%c0_1, %c0_2] : memref<16x128xf32, #tpu.memory_space<vmem>>, vector<16x128xf32>
    tpu.vector_store %arg2[%c0_1, %c0_2], %2 {strides = array<i32>} : memref<16x128xf32, #tpu.memory_space<vmem>>, vector<16x128xf32>,
    return
  }
  func.func @transform_0(%arg0: i32) -> (i32, i32) {
    %c0_i32 = arith.constant 0 : i32
    %c0_i32_0 = arith.constant 0 : i32
    return %arg0, %c0_i32 : i32, i32
  }
  func.func @transform_1(%arg0: i32) -> (i32, i32) {
    %c0_i32 = arith.constant 0 : i32
    %c0_i32_0 = arith.constant 0 : i32
    return %arg0, %c0_i32 : i32, i32
  }
}

</mosaic_0001>

<llo_original>
// kernel: tpu_custom_call.1
$region0: #{tpu_custom_call.1}
  #allocation0 [shape = 'u32[]', space=smem, size = 0x4, offset = 0x4, fixed_abs, tag = 'smem constant byte address 0x4 - core index']
  #allocation1 [shape = 'u32[144,128]{1,0:T(1,128)}', space=vmem, size = 0x12000, scoped, tag = 'internal scratch']
  %s0 = inlined_call_operand.hbm [shape: f32[16,128], index: 0, kind: input, shape index: {}]
  %s1 = inlined_call_operand.hbm [shape: f32[16,128], index: 1, kind: output, shape index: {}]
  %s2 = sld [smem:[#allocation0]]
  $region18: #{tpu_custom_call.1} parent=0
    _
  %s4 = ssub.s32 1, %s2
  %s5 = scalar_select 0, %s4, %s2
  $region1: #{tpu_custom_call.1} parent=0
    #allocation2 [shape = 'u8[8192]{0}', space=vmem, size = 0x2000, scoped, tag = 'input window, operand 0, single buffered']
    #allocation3 [shape = 's32[1]{0}', space=sflag, size = 0x4, scoped, tag = 'scoped memory for tpu_custom_call.1']
    #allocation4 [shape = 's32[1]{0}', space=sflag, size = 0x4, scoped, tag = 'scoped memory for tpu_custom_call.1']
    #allocation5 [shape = 'u8[8192]{0}', space=vmem, size = 0x2000, scoped, tag = 'output window, operand 0, single buffered']
    %6 = vsyncpa [#allocation3], 0
    %7 = vsyncpa [#allocation4], 0
    // Predicated region
    $region2: #{tpu_custom_call.1} parent=1 // pred_check
      _
    $region3: #{tpu_custom_call.1} parent=1 // pred_check_branch
      %9 = sbr.rel (0) target = $region5
    $region4: #{tpu_custom_call.1} parent=1 // pred_region
      %s11 = ssub.s32 256, 256
      %12 = vsyncadd [#allocation3], %s11
      %s13 = sshll.u32 [#allocation2], 4
      %s14 = int_to_ptr.vmem [resolvable:$true] %s13
      %19 = dma.hbm_to_vmem [thread:$0]  %s0, 256, %s14, [#allocation3], 128, 128, 8
    $region5: #{tpu_custom_call.1} parent=1 // pred_fallthru
      _
    // Predicated region
    $region6: #{tpu_custom_call.1} parent=1 // pred_check
      _
    $region7: #{tpu_custom_call.1} parent=1 // pred_check_branch
      %21 = sbr.rel (0) target = $region9
    $region8: #{tpu_custom_call.1} parent=1 // pred_region
      %22 = dma.done [#allocation3], 256
    $region9: #{tpu_custom_call.1} parent=1 // pred_fallthru
      _
    %v23 = vld [vmem:[#allocation2] sm:$0xff]
    %v24 = vld [vmem:[#allocation2 + $0x8] sm:$0xff]
    %v25 = vmul.f32 %v23, 0.0
    %v26 = vmul.f32 %v24, 0.0
    %27 = vst [vmem:[#allocation5] sm:$0xff] %v25
    %28 = vst [vmem:[#allocation5 + $0x8] sm:$0xff] %v26
    // Predicated region
    $region10: #{tpu_custom_call.1} parent=1 // pred_check
      _
    $region11: #{tpu_custom_call.1} parent=1 // pred_check_branch
      %30 = sbr.rel (0) target = $region13
    $region12: #{tpu_custom_call.1} parent=1 // pred_region
      %s32 = ssub.s32 256, 256
      %33 = vsyncadd [#allocation4], %s32
      %s34 = sshll.u32 [#allocation5], 4
      %s35 = int_to_ptr.vmem [resolvable:$true] %s34
      %40 = dma.vmem_to_hbm [thread:$0]  %s35, 256, %s1, [#allocation4], 128, 128, 8
    $region13: #{tpu_custom_call.1} parent=1 // pred_fallthru
      _
    // Predicated region
    $region14: #{tpu_custom_call.1} parent=1 // pred_check
      _
    $region15: #{tpu_custom_call.1} parent=1 // pred_check_branch
      %42 = sbr.rel (0) target = $region17
    $region16: #{tpu_custom_call.1} parent=1 // pred_region
      %43 = dma.done [#allocation4], 256
    $region17: #{tpu_custom_call.1} parent=1 // pred_fallthru
      _
    %44 = vsyncpa [#allocation3], 1
    %45 = vsyncpa [#allocation4], 1

</llo_original>
